<compile_context>
chip_gen: v5e
topology: v5e:2x2
jax: 0.10.0
libtpu: 0.0.40
codegen_flags: <defaults>
</compile_context>

<pallas_src>
import functools

import numpy as np
import jax
import jax.numpy as jnp
from jax.experimental import pallas as pl
from jax.experimental.pallas import tpu as pltpu

BN_EPS = 1e-5  # torch.nn.BatchNorm2d default


# ----------------------------------------------------------------------------
# Constant pooling matrices (built in numpy -> baked in as compile-time consts)
# ----------------------------------------------------------------------------
def _pool_matrix(in_size, stride):
    """1-D averaging matrix A of shape (out, in) for kernel=3, padding=1,
    count_include_pad=False:  A[i, r] = 1/valid_count(i) if r lies in window i.
    """
    out_size = (in_size + 2 * 1 - 3) // stride + 1
    i = np.arange(out_size)[:, None]
    r = np.arange(in_size)[None, :]
    start = i * stride - 1                       # window start in unpadded coords
    inside = (r >= start) & (r <= start + 2)
    A = inside.astype(np.float32)
    A /= A.sum(axis=1, keepdims=True)            # divide by #valid positions
    return A, out_size


# ----------------------------------------------------------------------------
# Fused Pallas kernels
# ----------------------------------------------------------------------------
def _pool_conv_bn_kernel(x_ref, p_ref, w_ref, b_ref, o_ref, *, conv_first):
    # x_ref: (1, C_in, H*W)   p_ref: (H*W, Ho*Wo)
    # w_ref: (C_out, C_in)    b_ref: (C_out, 1)   o_ref: (1, C_out, Ho*Wo)
    x = x_ref[0]
    if conv_first:
        # (C_out, C_in) @ (C_in, H*W) -> (C_out, H*W) -> pool
        mixed = jnp.dot(w_ref[...], x, preferred_element_type=jnp.float32)
        out = jnp.dot(mixed, p_ref[...], preferred_element_type=jnp.float32)
    else:
        # pool first -> (C_in, Ho*Wo), then mix channels
        pooled = jnp.dot(x, p_ref[...], preferred_element_type=jnp.float32)
        out = jnp.dot(w_ref[...], pooled, preferred_element_type=jnp.float32)
    o_ref[0] = (out + b_ref[...]).astype(o_ref.dtype)


def _pool_only_kernel(x_ref, p_ref, o_ref):
    pooled = jnp.dot(x_ref[0], p_ref[...],
                     preferred_element_type=jnp.float32)        # (C_in, Ho*Wo)
    o_ref[0] = pooled.astype(o_ref.dtype)


# ----------------------------------------------------------------------------
# Forward wrapper (external interface: NCHW float32, like the torch module)
# ----------------------------------------------------------------------------
def avgpool1x1_forward(x, params, *, stride):
    N, C, H, W = x.shape
    A_h, Ho = _pool_matrix(H, stride)
    A_w, Wo = _pool_matrix(W, stride)
    # P[(i*Wo + j), (r*W + c)] = A_h[i, r] * A_w[j, c];  pooled = x_flat @ P^T
    p_t = jnp.asarray(np.kron(A_h, A_w).T)                       # (H*W, Ho*Wo)

    x_flat = x.reshape(N, C, H * W)                              # free reshape

    apply_conv = stride > 1
    if apply_conv:
        w1 = params["conv_w"][:, :, 0, 0]                        # (C_out, C_in)
        scale = params["bn_gamma"] * jax.lax.rsqrt(params["bn_var"] + BN_EPS)
        w_fold = w1 * scale[:, None]
        b_fold = (params["bn_beta"] - params["bn_mean"] * scale)[:, None]
        C_out = w_fold.shape[0]
        # Re-associate the two matmuls to minimize MXU work (both orders are
        # mathematically identical since pooling and 1x1 conv are linear).
        conv_first = C_out < C
        args = (x_flat, p_t, w_fold, b_fold)
        in_specs = [
            pl.BlockSpec((1, C, H * W), lambda n: (n, 0, 0)),
            pl.BlockSpec((H * W, Ho * Wo), lambda n: (0, 0)),
            pl.BlockSpec((C_out, C), lambda n: (0, 0)),
            pl.BlockSpec((C_out, 1), lambda n: (0, 0)),
        ]
        kernel = functools.partial(_pool_conv_bn_kernel, conv_first=conv_first)
        if conv_first:
            flops = N * (2 * C_out * C * (H * W)
                         + 2 * C_out * (H * W) * (Ho * Wo))
        else:
            flops = N * (2 * C * (H * W) * (Ho * Wo)
                         + 2 * C_out * C * (Ho * Wo))
    else:
        C_out = C
        args = (x_flat, p_t)
        in_specs = [
            pl.BlockSpec((1, C, H * W), lambda n: (n, 0, 0)),
            pl.BlockSpec((H * W, Ho * Wo), lambda n: (0, 0)),
        ]
        kernel = _pool_only_kernel
        flops = N * 2 * C * (H * W) * (Ho * Wo)

    bytes_accessed = 4 * (sum(int(np.prod(a.shape)) for a in args)
                          + N * C_out * Ho * Wo)

    out_flat = pl.pallas_call(
        kernel,
        out_shape=jax.ShapeDtypeStruct((N, C_out, Ho * Wo), x.dtype),
        grid_spec=pltpu.PrefetchScalarGridSpec(
            num_scalar_prefetch=0,
            grid=(N,),
            in_specs=in_specs,
            out_specs=pl.BlockSpec((1, C_out, Ho * Wo), lambda n: (n, 0, 0)),
        ),
        compiler_params=pltpu.CompilerParams(
            dimension_semantics=("parallel",),
        ),
        cost_estimate=pl.CostEstimate(flops=flops, transcendentals=0,
                                      bytes_accessed=bytes_accessed),
    )(*args)

    return out_flat.reshape(N, C_out, Ho, Wo)                    # free reshape


# ----------------------------------------------------------------------------
# Pure-JAX reference (mirrors the torch module with eval-mode BatchNorm)
# ----------------------------------------------------------------------------
def _ref_avgpool3x3(x, stride):
    window = (1, 1, 3, 3)
    strides = (1, 1, stride, stride)
    pad = ((0, 0), (0, 0), (1, 1), (1, 1))
    sums = jax.lax.reduce_window(x, 0.0, jax.lax.add, window, strides, pad)
    cnts = jax.lax.reduce_window(jnp.ones_like(x), 0.0, jax.lax.add,
                                 window, strides, pad)
    return sums / cnts


def avgpool1x1_reference(x, params, *, stride):
    y = _ref_avgpool3x3(x, stride)
    if stride > 1:
        y = jnp.einsum("oc,nchw->nohw", params["conv_w"][:, :, 0, 0], y)
        scale = params["bn_gamma"] / jnp.sqrt(params["bn_var"] + BN_EPS)
        y = ((y - params["bn_mean"][None, :, None, None])
             * scale[None, :, None, None]
             + params["bn_beta"][None, :, None, None])
    return y


if __name__ == "__main__":
    key = jax.random.PRNGKey(0)
    k_x, k_w, k_g, k_b, k_m, k_v = jax.random.split(key, 6)

    N, C_in, H, W = 2, 4, 16, 16
    C_out = 8

    x = jax.random.normal(k_x, (N, C_in, H, W), dtype=jnp.float32)
    params = {
        "conv_w": 0.3 * jax.random.normal(k_w, (C_out, C_in, 1, 1), jnp.float32),
        "bn_gamma": 1.0 + 0.1 * jax.random.normal(k_g, (C_out,), jnp.float32),
        "bn_beta": 0.1 * jax.random.normal(k_b, (C_out,), jnp.float32),
        "bn_mean": 0.1 * jax.random.normal(k_m, (C_out,), jnp.float32),
        "bn_var": jnp.abs(jax.random.normal(k_v, (C_out,), jnp.float32)) + 0.5,
    }

    fwd = jax.jit(avgpool1x1_forward, static_argnames=("stride",))

    # stride > 1 path: avgpool -> 1x1 conv -> (eval-mode) BN, fully fused.
    out2 = jax.block_until_ready(fwd(x, params, stride=2))
    ref2 = jax.block_until_ready(avgpool1x1_reference(x, params, stride=2))
    assert out2.shape == (N, C_out, H // 2, W // 2), out2.shape
    assert jnp.allclose(out2, ref2, atol=1e-4, rtol=1e-4), \
        float(jnp.max(jnp.abs(out2 - ref2)))

    # stride == 1 path: average pooling only.
    out1 = jax.block_until_ready(fwd(x, params, stride=1))
    ref1 = jax.block_until_ready(avgpool1x1_reference(x, params, stride=1))
    assert out1.shape == (N, C_in, H, W), out1.shape
    assert jnp.allclose(out1, ref1, atol=1e-4, rtol=1e-4), \
        float(jnp.max(jnp.abs(out1 - ref1)))

    print("KERNEL_OK")
</pallas_src>

<mosaic_0001>
module attributes {stable_mosaic.version = 11 : i64} {
  func.func @_pool_conv_bn_kernel(%arg0: i32, %arg1: memref<1x4x256xf32, #tpu.memory_space<vmem>>, %arg2: memref<256x64xf32, #tpu.memory_space<vmem>>, %arg3: memref<8x4xf32, #tpu.memory_space<vmem>>, %arg4: memref<8x1xf32, #tpu.memory_space<vmem>>, %arg5: memref<1x8x64xf32, #tpu.memory_space<vmem>>) attributes {dimension_semantics = [#tpu.dimension_semantics<parallel>], iteration_bounds = array<i64: 2>, scalar_prefetch = 0 : i64, scratch_operands = 0 : i64, tpu.core_type = #tpu.core_type<tc>, window_params = [{transform_indices = @transform_0, window_bounds = array<i64: 1, 4, 256>}, {pipeline_mode = #tpu.pipeline_mode<synchronous>, transform_indices = @transform_1, window_bounds = array<i64: 256, 64>}, {pipeline_mode = #tpu.pipeline_mode<synchronous>, transform_indices = @transform_2, window_bounds = array<i64: 8, 4>}, {pipeline_mode = #tpu.pipeline_mode<synchronous>, transform_indices = @transform_3, window_bounds = array<i64: 8, 1>}, {transform_indices = @transform_4, window_bounds = array<i64: 1, 8, 64>}]} {
    %c0 = arith.constant 0 : index
    %c0_0 = arith.constant 0 : index
    %c0_1 = arith.constant 0 : index
    %0 = vector.load %arg1[%c0, %c0_0, %c0_1] : memref<1x4x256xf32, #tpu.memory_space<vmem>>, vector<1x4x256xf32>
    %1 = vector.shape_cast %0 : vector<1x4x256xf32> to vector<4x256xf32>
    %c0_2 = arith.constant 0 : index
    %c0_3 = arith.constant 0 : index
    %2 = vector.load %arg2[%c0_2, %c0_3] : memref<256x64xf32, #tpu.memory_space<vmem>>, vector<256x64xf32>
    %cst = arith.constant dense<0.000000e+00> : vector<4x64xf32>
    %3 = tpu.matmul %1, %2, %cst {dimension_numbers = #tpu.dot_dimension_numbers<[1], [0], [0], [1], [0, 0, 1, 1], [], []>} : vector<4x256xf32>, vector<256x64xf32>, vector<4x64xf32> -> vector<4x64xf32>
    %c0_4 = arith.constant 0 : index
    %c0_5 = arith.constant 0 : index
    %4 = vector.load %arg3[%c0_4, %c0_5] : memref<8x4xf32, #tpu.memory_space<vmem>>, vector<8x4xf32>
    %cst_6 = arith.constant dense<0.000000e+00> : vector<8x64xf32>
    %5 = tpu.matmul %4, %3, %cst_6 {dimension_numbers = #tpu.dot_dimension_numbers<[1], [0], [0], [1], [0, 0, 1, 1], [], []>} : vector<8x4xf32>, vector<4x64xf32>, vector<8x64xf32> -> vector<8x64xf32>
    %c0_7 = arith.constant 0 : index
    %c0_8 = arith.constant 0 : index
    %6 = vector.load %arg4[%c0_7, %c0_8] : memref<8x1xf32, #tpu.memory_space<vmem>>, vector<8x1xf32>
    %7 = vector.broadcast %6 : vector<8x1xf32> to vector<8x64xf32>
    %8 = arith.addf %5, %7 : vector<8x64xf32>
    %c0_9 = arith.constant 0 : index
    %c0_10 = arith.constant 0 : index
    %c0_11 = arith.constant 0 : index
    %9 = vector.load %arg5[%c0_9, %c0_10, %c0_11] : memref<1x8x64xf32, #tpu.memory_space<vmem>>, vector<1x8x64xf32>
    %10 = vector.shape_cast %9 : vector<1x8x64xf32> to vector<8x64xf32>
    %11 = vector.shape_cast %8 : vector<8x64xf32> to vector<1x8x64xf32>
    tpu.vector_store %arg5[%c0_9, %c0_10, %c0_11], %11 {strides = array<i32>} : memref<1x8x64xf32, #tpu.memory_space<vmem>>, vector<1x8x64xf32>,
    return
  }
  func.func @transform_0(%arg0: i32) -> (i32, i32, i32) {
    %c0_i32 = arith.constant 0 : i32
    %c0_i32_0 = arith.constant 0 : i32
    %c0_i32_1 = arith.constant 0 : i32
    return %arg0, %c0_i32, %c0_i32_0 : i32, i32, i32
  }
  func.func @transform_1(%arg0: i32) -> (i32, i32) {
    %c0_i32 = arith.constant 0 : i32
    %c0_i32_0 = arith.constant 0 : i32
    %c0_i32_1 = arith.constant 0 : i32
    return %c0_i32, %c0_i32_0 : i32, i32
  }
  func.func @transform_2(%arg0: i32) -> (i32, i32) {
    %c0_i32 = arith.constant 0 : i32
    %c0_i32_0 = arith.constant 0 : i32
    %c0_i32_1 = arith.constant 0 : i32
    return %c0_i32, %c0_i32_0 : i32, i32
  }
  func.func @transform_3(%arg0: i32) -> (i32, i32) {
    %c0_i32 = arith.constant 0 : i32
    %c0_i32_0 = arith.constant 0 : i32
    %c0_i32_1 = arith.constant 0 : i32
    return %c0_i32, %c0_i32_0 : i32, i32
  }
  func.func @transform_4(%arg0: i32) -> (i32, i32, i32) {
    %c0_i32 = arith.constant 0 : i32
    %c0_i32_0 = arith.constant 0 : i32
    %c0_i32_1 = arith.constant 0 : i32
    return %arg0, %c0_i32, %c0_i32_0 : i32, i32, i32
  }
}

</mosaic_0001>

<llo_original>
// kernel: avgpool1x1_forward.1
$region0: #{avgpool1x1_forward.1}
  #allocation0 [shape = 'u32[]', space=smem, size = 0x4, offset = 0x4, fixed_abs, tag = 'smem constant byte address 0x4 - core index']
  #allocation1 [shape = 'u32[72,128]{1,0:T(1,128)}', space=vmem, size = 0x9000, scoped, tag = 'internal scratch']
  %s0 = inlined_call_operand.vmem [shape: f32[2,4,256], index: 0, kind: input, shape index: {}]
  %s1 = inlined_call_operand.hbm [shape: f32[256,64], index: 1, kind: input, shape index: {}]
  %s2 = inlined_call_operand.vmem [shape: f32[8,4], index: 2, kind: input, shape index: {}]
  %s3 = inlined_call_operand.vmem [shape: f32[8,1], index: 3, kind: input, shape index: {}]
  %s4 = inlined_call_operand.vmem [shape: f32[2,8,64], index: 4, kind: output, shape index: {}]
  %s5 = sld [smem:[#allocation0]]
  $region53: #{avgpool1x1_forward.1} parent=0
    _
  %s7 = ssub.s32 1, %s5
  %s8 = scalar_select 0, %s7, %s5
  $region1: #{avgpool1x1_forward.1} parent=0
    #allocation2 [shape = 'u8[131072]{0}', space=vmem, size = 0x20000, scoped, tag = 'input window, operand 1, single buffered']
    #allocation3 [shape = 's32[2]{0}', space=sflag, size = 0x8, scoped, tag = 'scoped memory for avgpool1x1_forward.1']
    %9 = vsyncpa [#allocation3], 0
    loop: start=0, step=1, limit=4
    $region2: #{avgpool1x1_forward.1} parent=1 // loop_pre_header
      _
    $region3: #{avgpool1x1_forward.1} parent=1 // loop_header
      %s11 = sphi 0, %s15
      %p12 = scmp.ge.s32.totalorder %s11, 4
      %s21 = sphi 0, %s23
      %s24 = sphi 0, %s21
      %s25 = sphi 0, %s24
      %s41 = sphi 0, %s25
      %s45 = sphi 0, %s45
      %s47 = sphi 0, %s45
      %s48 = sphi 0, %s47
      %s62 = sphi 0, %s48
      %s66 = sphi 0, %s66
      %s68 = sphi 0, %s66
      %s69 = sphi 0, %s68
      %s83 = sphi 0, %s69
      %s87 = sphi 0, %s87
      %s89 = sphi 0, %s87
      %s90 = sphi 0, %s89
      %s104 = sphi 0, %s90
      %s110 = sphi 0, %s112
      %s113 = sphi 0, %s110
      %s114 = sphi 0, %s113
      %s130 = sphi 0, %s114
    $region4: #{avgpool1x1_forward.1} parent=1 // loop_header_branch
      %14 = sbr.rel (%p12) target = $region8
    $region5: #{avgpool1x1_forward.1} parent=1 // loop_body
      %s16 = ssub.s32 %s11, 1
      %s17 = ssub.s32 %s11, 2
      %s18 = sadd.s32 %s11, 1
      %s19 = ssub.s32 %s11, %s18
      %p20 = scmp.eq.s32.totalorder %s19, 0
      %s22 = sadd.s32 %s21, 1
      %s23 = scalar_select %p20, %s21, %s22
      %p26 = pneg %p20
      %p27 = scmp.eq.s32.totalorder %s11, 1
      %p28 = por %p26, %p27
      %p29 = scmp.ne.s32.totalorder %s21, %s24
      %p30 = scmp.eq.s32.totalorder %s11, 0
      %p31 = por %p29, %p30
      %p32 = scmp.ne.s32.totalorder %s21, %s24
      %p33 = scmp.eq.s32.totalorder %s16, 1
      %p34 = por %p32, %p33
      %p35 = scmp.ne.s32.totalorder %s24, %s25
      %p36 = scmp.eq.s32.totalorder %s16, 0
      %p37 = por %p35, %p36
      %p38 = scmp.ne.s32.totalorder %s24, %s25
      %p39 = scmp.eq.s32.totalorder %s17, 1
      %p40 = por %p38, %p39
      %p42 = scmp.ne.s32.totalorder %s25, %s41
      %p43 = scmp.eq.s32.totalorder %s17, 0
      %p44 = por %p42, %p43
      %s46 = sadd.s32 %s45, 1
      %p49 = scmp.eq.s32.totalorder %s11, 1
      %p50 = scmp.ne.s32.totalorder %s45, %s47
      %p51 = scmp.eq.s32.totalorder %s11, 0
      %p52 = por %p50, %p51
      %p53 = scmp.ne.s32.totalorder %s45, %s47
      %p54 = scmp.eq.s32.totalorder %s16, 1
      %p55 = por %p53, %p54
      %p56 = scmp.ne.s32.totalorder %s47, %s48
      %p57 = scmp.eq.s32.totalorder %s16, 0
      %p58 = por %p56, %p57
      %p59 = scmp.ne.s32.totalorder %s47, %s48
      %p60 = scmp.eq.s32.totalorder %s17, 1
      %p61 = por %p59, %p60
      %p63 = scmp.ne.s32.totalorder %s48, %s62
      %p64 = scmp.eq.s32.totalorder %s17, 0
      %p65 = por %p63, %p64
      %s67 = sadd.s32 %s66, 1
      %p70 = scmp.eq.s32.totalorder %s11, 1
      %p71 = scmp.ne.s32.totalorder %s66, %s68
      %p72 = scmp.eq.s32.totalorder %s11, 0
      %p73 = por %p71, %p72
      %p74 = scmp.ne.s32.totalorder %s66, %s68
      %p75 = scmp.eq.s32.totalorder %s16, 1
      %p76 = por %p74, %p75
      %p77 = scmp.ne.s32.totalorder %s68, %s69
      %p78 = scmp.eq.s32.totalorder %s16, 0
      %p79 = por %p77, %p78
      %p80 = scmp.ne.s32.totalorder %s68, %s69
      %p81 = scmp.eq.s32.totalorder %s17, 1
      %p82 = por %p80, %p81
      %p84 = scmp.ne.s32.totalorder %s69, %s83
      %p85 = scmp.eq.s32.totalorder %s17, 0
      %p86 = por %p84, %p85
      %s88 = sadd.s32 %s87, 1
      %p91 = scmp.eq.s32.totalorder %s11, 1
      %p92 = scmp.ne.s32.totalorder %s87, %s89
      %p93 = scmp.eq.s32.totalorder %s11, 0
      %p94 = por %p92, %p93
      %p95 = scmp.ne.s32.totalorder %s87, %s89
      %p96 = scmp.eq.s32.totalorder %s16, 1
      %p97 = por %p95, %p96
      %p98 = scmp.ne.s32.totalorder %s89, %s90
      %p99 = scmp.eq.s32.totalorder %s16, 0
      %p100 = por %p98, %p99
      %p101 = scmp.ne.s32.totalorder %s89, %s90
      %p102 = scmp.eq.s32.totalorder %s17, 1
      %p103 = por %p101, %p102
      %p105 = scmp.ne.s32.totalorder %s90, %s104
      %p106 = scmp.eq.s32.totalorder %s17, 0
      %p107 = por %p105, %p106
      %s108 = ssub.s32 %s11, %s18
      %p109 = scmp.eq.s32.totalorder %s108, 0
      %s111 = sadd.s32 %s110, 1
      %s112 = scalar_select %p109, %s110, %s111
      %p115 = pneg %p109
      %p116 = scmp.eq.s32.totalorder %s11, 1
      %p117 = por %p115, %p116
      %p118 = scmp.ne.s32.totalorder %s110, %s113
      %p119 = scmp.eq.s32.totalorder %s11, 0
      %p120 = por %p118, %p119
      %p121 = scmp.ne.s32.totalorder %s110, %s113
      %p122 = scmp.eq.s32.totalorder %s16, 1
      %p123 = por %p121, %p122
      %p124 = scmp.ne.s32.totalorder %s113, %s114
      %p125 = scmp.eq.s32.totalorder %s16, 0
      %p126 = por %p124, %p125
      %p127 = scmp.ne.s32.totalorder %s113, %s114
      %p128 = scmp.eq.s32.totalorder %s17, 1
      %p129 = por %p127, %p128
      %p131 = scmp.ne.s32.totalorder %s114, %s130
      %p132 = scmp.eq.s32.totalorder %s17, 0
      %p133 = por %p131, %p132
      %p134 = scmp.le.s32.totalorder 1, %s11
      %p135 = scmp.lt.s32.totalorder %s11, 3
      %p136 = pnand %p134, %p135
      %p137 = pneg %p136
      // Predicated region
      $region9: #{avgpool1x1_forward.1} parent=5 // pred_check
        _
      $region10: #{avgpool1x1_forward.1} parent=5 // pred_check_branch
        %139 = sbr.rel (%p136) target = $region12
      $region11: #{avgpool1x1_forward.1} parent=5 // pred_region
        %s140 = ssub.s32 %s11, 1
        // Predicated region
        $region13: #{avgpool1x1_forward.1} parent=11 // pred_check
          %p141 = pneg %p58
        $region14: #{avgpool1x1_forward.1} parent=11 // pred_check_branch
          %143 = sbr.rel (%p141) target = $region16
        $region15: #{avgpool1x1_forward.1} parent=11 // pred_region
          %145 = vsyncadd [#allocation3], 0
          %s146 = sshll.u32 %s1, 4
          %s147 = int_to_ptr.hbm [resolvable:$true] %s146
          %s148 = sshll.u32 [#allocation2], 4
          %s149 = int_to_ptr.vmem [resolvable:$true] %s148
          %154 = dma.hbm_to_vmem [thread:$0]  %s147, 4096, %s149, [#allocation3], 128, 128, 8
        $region16: #{avgpool1x1_forward.1} parent=11 // pred_fallthru
          _
        // Predicated region
        $region17: #{avgpool1x1_forward.1} parent=11 // pred_check
          %p155 = pneg %p79
        $region18: #{avgpool1x1_forward.1} parent=11 // pred_check_branch
          %157 = sbr.rel (%p155) target = $region20
        $region19: #{avgpool1x1_forward.1} parent=11 // pred_region
          _
        $region20: #{avgpool1x1_forward.1} parent=11 // pred_fallthru
          _
        // Predicated region
        $region21: #{avgpool1x1_forward.1} parent=11 // pred_check
          %p158 = pneg %p100
        $region22: #{avgpool1x1_forward.1} parent=11 // pred_check_branch
          %160 = sbr.rel (%p158) target = $region24
        $region23: #{avgpool1x1_forward.1} parent=11 // pred_region
          _
        $region24: #{avgpool1x1_forward.1} parent=11 // pred_fallthru
          _
      $region12: #{avgpool1x1_forward.1} parent=5 // pred_fallthru
        _
      %p161 = scmp.lt.s32.totalorder %s11, 2
      // Predicated region
      $region25: #{avgpool1x1_forward.1} parent=5 // pred_check
        %p162 = pneg %p161
      $region26: #{avgpool1x1_forward.1} parent=5 // pred_check_branch
        %164 = sbr.rel (%p162) target = $region28
      $region27: #{avgpool1x1_forward.1} parent=5 // pred_region
        // Predicated region
        $region29: #{avgpool1x1_forward.1} parent=27 // pred_check
          %p165 = pneg %p31
        $region30: #{avgpool1x1_forward.1} parent=27 // pred_check_branch
          %167 = sbr.rel (%p165) target = $region32
        $region31: #{avgpool1x1_forward.1} parent=27 // pred_region
          %p168 = scmp.lt.s32.totalorder %s11, 1
          %s169 = scalar_select %p168, %s11, 1
          %s170 = smul.addr %s169, 2
          %s171 = smul.addr %s170, 4
          %s172 = scalar_lea.vmem %s0, %s171
        $region32: #{avgpool1x1_forward.1} parent=27 // pred_fallthru
          _
      $region28: #{avgpool1x1_forward.1} parent=5 // pred_fallthru
        _
      %p173 = scmp.le.s32.totalorder 1, %s11
      %p174 = scmp.lt.s32.totalorder %s11, 3
      %p175 = pnand %p173, %p174
      %p176 = pneg %p175
      // Predicated region
      $region33: #{avgpool1x1_forward.1} parent=5 // pred_check
        _
      $region34: #{avgpool1x1_forward.1} parent=5 // pred_check_branch
        %178 = sbr.rel (%p175) target = $region36
      $region35: #{avgpool1x1_forward.1} parent=5 // pred_region
        %s179 = ssub.s32 %s11, 1
        // Predicated region
        $region37: #{avgpool1x1_forward.1} parent=35 // pred_check
          %p180 = pneg %p58
        $region38: #{avgpool1x1_forward.1} parent=35 // pred_check_branch
          %182 = sbr.rel (%p180) target = $region40
        $region39: #{avgpool1x1_forward.1} parent=35 // pred_region
          %184 = dma.done [#allocation3], 4096
        $region40: #{avgpool1x1_forward.1} parent=35 // pred_fallthru
          _
        %p185 = scmp.lt.s32.totalorder %s16, 1
        %s186 = scalar_select %p185, %s16, 1
        %s187 = smul.addr %s186, 2
        %s188 = smul.addr %s187, 4
        %s189 = scalar_lea.vmem %s0, %s188
        %p190 = pneg %p37
        %p191 = pneg %p34
        %p192 = pneg %p58
        %p193 = pneg %p55
        %p194 = pneg %p79
        %p195 = pneg %p76
        %p196 = pneg %p100
        %p197 = pneg %p97
        %p198 = pneg %p126
        %p199 = pneg %p123
        %p200 = scmp.lt.s32.totalorder %s16, 1
        %s201 = scalar_select %p200, %s16, 1
        %s202 = smul.addr %s201, 8
        %s203 = scalar_lea.vmem %s4, %s202
        %p204 = scmp.lt.s32.totalorder %s16, 1
        %s205 = scalar_select %p204, %s16, 1
        %s206 = smul.addr %s205, 2
        %s207 = smul.addr %s206, 4
        %s208 = scalar_lea.vmem %s0, %s207
        %p209 = scmp.lt.s32.totalorder %s16, 1
        %s210 = scalar_select %p209, %s16, 1
        %s211 = smul.addr %s210, 8
        %s212 = scalar_lea.vmem %s4, %s211
        %v213 = vld [vmem:[%s208] sm:$0xff]
        %v214 = vld [vmem:[#allocation2] sm:$0xff]
        %v215 = vld [vmem:[#allocation2 + $0x8] sm:$0xff]
        %v216 = vld [vmem:[#allocation2 + $0x10] sm:$0xff]
        %v217 = vld [vmem:[#allocation2 + $0x18] sm:$0xff]
        %v218 = vld [vmem:[#allocation2 + $0x20] sm:$0xff]
        %v219 = vld [vmem:[#allocation2 + $0x28] sm:$0xff]
        %v220 = vld [vmem:[#allocation2 + $0x30] sm:$0xff]
        %v221 = vld [vmem:[#allocation2 + $0x38] sm:$0xff]
        %v222 = vld [vmem:[#allocation2 + $0x40] sm:$0xff]
        %v223 = vld [vmem:[#allocation2 + $0x48] sm:$0xff]
        %v224 = vld [vmem:[#allocation2 + $0x50] sm:$0xff]
        %v225 = vld [vmem:[#allocation2 + $0x58] sm:$0xff]
        %v226 = vld [vmem:[#allocation2 + $0x60] sm:$0xff]
        %v227 = vld [vmem:[#allocation2 + $0x68] sm:$0xff]
        %v228 = vld [vmem:[#allocation2 + $0x70] sm:$0xff]
        %v229 = vld [vmem:[#allocation2 + $0x78] sm:$0xff]
        %v230 = vld [vmem:[#allocation2 + $0x80] sm:$0xff]
        %v231 = vld [vmem:[#allocation2 + $0x88] sm:$0xff]
        %v232 = vld [vmem:[#allocation2 + $0x90] sm:$0xff]
        %v233 = vld [vmem:[#allocation2 + $0x98] sm:$0xff]
        %v234 = vld [vmem:[#allocation2 + $0xa0] sm:$0xff]
        %v235 = vld [vmem:[#allocation2 + $0xa8] sm:$0xff]
        %v236 = vld [vmem:[#allocation2 + $0xb0] sm:$0xff]
        %v237 = vld [vmem:[#allocation2 + $0xb8] sm:$0xff]
        %v238 = vld [vmem:[#allocation2 + $0xc0] sm:$0xff]
        %v239 = vld [vmem:[#allocation2 + $0xc8] sm:$0xff]
        %v240 = vld [vmem:[#allocation2 + $0xd0] sm:$0xff]
        %v241 = vld [vmem:[#allocation2 + $0xd8] sm:$0xff]
        %v242 = vld [vmem:[#allocation2 + $0xe0] sm:$0xff]
        %v243 = vld [vmem:[#allocation2 + $0xe8] sm:$0xff]
        %v244 = vld [vmem:[#allocation2 + $0xf0] sm:$0xff]
        %v245 = vld [vmem:[#allocation2 + $0xf8] sm:$0xff]
        %247 = vst [vmem:[#allocation1] ss:$2 sm:$0xff] %v213
        %v248 = vld.sshfl [vmem:[#allocation1] sm:$0xff pattern:$0x75316420]
        %v249 = vld.sshfl [vmem:[#allocation1 + $0x8] sm:$0xff pattern:$0x75316420]
        %252 = vmatpush.msra.mxu0 %v229
        %253 = vmatpush.msra.mxu0 %v228
        %254 = vmatpush.msra.mxu0 %v227
        %255 = vmatpush.msra.mxu0 %v226
        %256 = vmatpush.msra.mxu0 %v225
        %257 = vmatpush.msra.mxu0 %v224
        %258 = vmatpush.msra.mxu0 %v223
        %259 = vmatpush.msra.mxu0 %v222
        %260 = vmatpush.msra.mxu0 %v221
        %261 = vmatpush.msra.mxu0 %v220
        %262 = vmatpush.msra.mxu0 %v219
        %263 = vmatpush.msra.mxu0 %v218
        %264 = vmatpush.msra.mxu0 %v217
        %265 = vmatpush.msra.mxu0 %v216
        %266 = vmatpush.msra.mxu0 %v215
        %267 = vmatpush.msra.mxu0 %v214
        %268 = vmatmul.f32.gmra.mxu0 %v248
        %v269 = vpop.f32.mrf.mxu0
        %v270 = vadd.f32 0.0, %v269
        %271 = vdwg.mxu0
        %272 = vmatpush.msra.mxu0 %v245
        %273 = vmatpush.msra.mxu0 %v244
        %274 = vmatpush.msra.mxu0 %v243
        %275 = vmatpush.msra.mxu0 %v242
        %276 = vmatpush.msra.mxu0 %v241
        %277 = vmatpush.msra.mxu0 %v240
        %278 = vmatpush.msra.mxu0 %v239
        %279 = vmatpush.msra.mxu0 %v238
        %280 = vmatpush.msra.mxu0 %v237
        %281 = vmatpush.msra.mxu0 %v236
        %282 = vmatpush.msra.mxu0 %v235
        %283 = vmatpush.msra.mxu0 %v234
        %284 = vmatpush.msra.mxu0 %v233
        %285 = vmatpush.msra.mxu0 %v232
        %286 = vmatpush.msra.mxu0 %v231
        %287 = vmatpush.msra.mxu0 %v230
        %288 = vmatmul.f32.gmra.mxu0 %v249
        %v289 = vpop.f32.mrf.mxu0
        %v290 = vadd.f32 %v270, %v289
        %291 = vdwg.mxu0
        %v292 = vld [vmem:[%s2] sm:$0xff]
        %v293 = vld [vmem:[%s3] sm:$0xff]
        %295 = vset.pattern.permute.xlu0 0
        %296 = vperm.xlu0 %295, %v293
        %v297 = vpop.permute.xlu0 %296
        %vm299 = vcmask 31744
        %v301 = vsel %vm299, %v292, 0
        %vm303 = vcmask 1043456
        %v305 = vsel %vm303, %v290, 0
        %307 = vmatpush.msra.mxu0 0.0
        %308 = vmatpush.msra.mxu0 0.0
        %309 = vmatpush.msra.mxu0 0.0
        %310 = vmatpush.msra.mxu0 0.0
        %311 = vmatpush.msra.mxu0 0.0
        %312 = vmatpush.msra.mxu0 0.0
        %313 = vmatpush.msra.mxu0 0.0
        %314 = vmatpush.msra.mxu0 0.0
        %315 = vmatpush.msra.mxu0 0.0
        %316 = vmatpush.msra.mxu0 0.0
        %317 = vmatpush.msra.mxu0 0.0
        %318 = vmatpush.msra.mxu0 0.0
        %319 = vmatpush.msra.mxu0 0.0
        %320 = vmatpush.msra.mxu0 0.0
        %321 = vmatpush.msra.mxu0 0.0
        %322 = vmatpush.msra.mxu0 %v305
        %323 = vmatmul.f32.gmra.mxu0 %v301
        %v324 = vpop.f32.mrf.mxu0
        %v325 = vadd.f32 %v297, %v324
        %326 = vdwg.mxu0
        %vm327 = vcmask 523264
        %328 = vst.msk [vmem:[%s212] sm:$0xff] %vm327, %v325
        %p329 = scmp.lt.s32.totalorder %s16, 1
        %s330 = scalar_select %p329, %s16, 1
        %s331 = smul.addr %s330, 8
        %s332 = scalar_lea.vmem %s4, %s331
        // Predicated region
        $region41: #{avgpool1x1_forward.1} parent=35 // pred_check
          %p333 = pneg %p123
        $region42: #{avgpool1x1_forward.1} parent=35 // pred_check_branch
          %335 = sbr.rel (%p333) target = $region44
        $region43: #{avgpool1x1_forward.1} parent=35 // pred_region
          _
        $region44: #{avgpool1x1_forward.1} parent=35 // pred_fallthru
          _
      $region36: #{avgpool1x1_forward.1} parent=5 // pred_fallthru
        _
      %p336 = scmp.le.s32.totalorder 2, %s11
      // Predicated region
      $region45: #{avgpool1x1_forward.1} parent=5 // pred_check
        %p337 = pneg %p336
      $region46: #{avgpool1x1_forward.1} parent=5 // pred_check_branch
        %339 = sbr.rel (%p337) target = $region48
      $region47: #{avgpool1x1_forward.1} parent=5 // pred_region
        %s340 = ssub.s32 %s11, 2
        // Predicated region
        $region49: #{avgpool1x1_forward.1} parent=47 // pred_check
          %p341 = pneg %p129
        $region50: #{avgpool1x1_forward.1} parent=47 // pred_check_branch
          %343 = sbr.rel (%p341) target = $region52
        $region51: #{avgpool1x1_forward.1} parent=47 // pred_region
          %p344 = scmp.lt.s32.totalorder %s17, 1
          %s345 = scalar_select %p344, %s17, 1
          %s346 = smul.addr %s345, 8
          %s347 = scalar_lea.vmem %s4, %s346
        $region52: #{avgpool1x1_forward.1} parent=47 // pred_fallthru
          _
      $region48: #{avgpool1x1_forward.1} parent=5 // pred_fallthru
        _
    $region6: #{avgpool1x1_forward.1} parent=1 // loop_footer
      %s15 = sadd.s32 1, %s11
    $region7: #{avgpool1x1_forward.1} parent=1 // loop_footer_branch
      %10 = sbr.rel target = $region3
    $region8: #{avgpool1x1_forward.1} parent=1 // loop_exit
      _
    %348 = vsyncpa [#allocation3], 1
    %s349 = scalar_lea.sflag [#allocation3], 1
    %350 = vsyncpa %s349, 1

</llo_original>
